<compile_context>
chip_gen: v6e
topology: v6e:2x2x1
jax: 0.10.0
libtpu: 0.0.40
codegen_flags: <defaults>
</compile_context>

<pallas_src>
import jax
import jax.numpy as jnp
from jax.experimental import pallas as pl
from jax.experimental.pallas import tpu as pltpu


# ---------------- fused Pallas kernel ----------------

def _make_fused_kernel(num_layers: int, noise_dim: int):
    """Build the fused MLP kernel for a fixed layer count (traced once)."""

    def kernel(*refs):
        # refs = (noise, prop, w0, b0, w1, b1, ..., w_{L-1}, b_{L-1}, out)
        noise_ref, prop_ref = refs[0], refs[1]
        wb = refs[2:2 + 2 * num_layers]
        o_ref = refs[2 + 2 * num_layers]

        # ---- layer 0: folded concat + Linear + LeakyReLU(0.2) ----
        w0 = wb[0][...]                                  # (in_size, hidden)
        b0 = wb[1][...]                                  # (1, hidden)
        z = (jnp.dot(noise_ref[...], w0[:noise_dim, :],
                     preferred_element_type=jnp.float32)
             + jnp.dot(prop_ref[...], w0[noise_dim:, :],
                       preferred_element_type=jnp.float32)
             + b0)
        x = jnp.maximum(z, 0.2 * z)                      # LeakyReLU(0.2)

        # ---- hidden layers: Linear + LeakyReLU(0.2) ----
        for li in range(1, num_layers - 1):
            w = wb[2 * li][...]
            b = wb[2 * li + 1][...]
            z = jnp.dot(x, w, preferred_element_type=jnp.float32) + b
            x = jnp.maximum(z, 0.2 * z)

        # ---- final layer: Linear + numerically-stable Softmax(dim=-1) ----
        w = wb[2 * (num_layers - 1)][...]
        b = wb[2 * (num_layers - 1) + 1][...]
        z = jnp.dot(x, w, preferred_element_type=jnp.float32) + b
        z = z - jnp.max(z, axis=-1, keepdims=True)
        e = jnp.exp(z)
        denom = jnp.sum(e, axis=-1, keepdims=True)
        # Exact reciprocal keeps f32-level parity with the PyTorch softmax.
        # pl.reciprocal(denom, approx=True) is a free EUP micro-opt if ~2^-12
        # relative error is acceptable.
        o_ref[...] = (e * pl.reciprocal(denom)).astype(o_ref.dtype)

    return kernel


def _fused_forward(params, noise, prop):
    """Whole Generator forward as a single pallas_call (run under jax.jit)."""
    num_layers = len(params)
    noise_dim = noise.shape[-1]
    batch = noise.shape[0]
    out_size = params[-1][0].shape[1]

    flat_inputs = [noise, prop]
    for w, b in params:
        flat_inputs.extend((w, b))

    # Everything is tiny: each operand is one full-array VMEM block
    # (block_shape == full array dims satisfies the (8,128) tiling rule).
    # All operands are 2-D, so the block index is always (0, 0).
    in_specs = [pl.BlockSpec(a.shape, lambda i: (0, 0)) for a in flat_inputs]
    out_spec = pl.BlockSpec((batch, out_size), lambda i: (0, 0))

    kernel = _make_fused_kernel(num_layers, noise_dim)

    return pl.pallas_call(
        kernel,
        out_shape=jax.ShapeDtypeStruct((batch, out_size), noise.dtype),
        grid=(1,),
        in_specs=in_specs,
        out_specs=out_spec,
        compiler_params=pltpu.CompilerParams(
            dimension_semantics=("arbitrary",)),
    )(*flat_inputs)


# jit collapses host->device dispatch overhead around the single pallas_call.
generator_forward = jax.jit(_fused_forward)


# ---------------- Generator (parameters + forward) ----------------

class GeneratorPallas:
    def __init__(self, in_size, n_hidden_layers, hidden_size, out_size, key):
        # Layer dims: in -> hidden -> hidden*n_hidden_layers -> out
        dims = [in_size] + [hidden_size] * (n_hidden_layers + 1) + [out_size]
        self.params = []
        for i in range(len(dims) - 1):
            key, kw, kb = jax.random.split(key, 3)
            fan_in = dims[i]
            bound = 1.0 / float(jnp.sqrt(fan_in))
            # Deterministic init mimicking nn.Linear's U(-1/sqrt(fan_in), ...)
            w = jax.random.uniform(kw, (dims[i], dims[i + 1]),
                                   jnp.float32, -bound, bound)
            b = jax.random.uniform(kb, (1, dims[i + 1]),
                                   jnp.float32, -bound, bound)
            self.params.append((w, b))

    def __call__(self, noise, prop):
        # No JAX-side concat: folded into the fused kernel's first matmul.
        return generator_forward(self.params, noise, prop)


# ---------------- demo / smoke test ----------------

if __name__ == "__main__":
    key = jax.random.PRNGKey(0)
    k_noise, k_prop, k_params = jax.random.split(key, 3)

    batch = 8
    noise_dim = 16
    prop_dim = 16
    in_size = noise_dim + prop_dim      # Linear sees concat(noise, prop)
    n_hidden_layers = 2
    hidden_size = 32
    out_size = 16

    noise = jax.random.normal(k_noise, (batch, noise_dim), jnp.float32)
    prop = jax.random.normal(k_prop, (batch, prop_dim), jnp.float32)

    gen = GeneratorPallas(in_size, n_hidden_layers, hidden_size, out_size,
                          k_params)
    out = gen(noise, prop)
    out = jax.block_until_ready(out)

    # Pure-JAX reference to sanity-check fused-kernel semantics.
    def ref_forward(noise, prop, params):
        x = jnp.concatenate((noise, prop), axis=-1)
        for (w, b) in params[:-1]:
            z = x @ w + b
            x = jnp.where(z >= 0.0, z, 0.2 * z)
        w, b = params[-1]
        z = x @ w + b
        return jax.nn.softmax(z, axis=-1)

    ref = ref_forward(noise, prop, gen.params)
    assert out.shape == (batch, out_size)
    assert jnp.allclose(out, ref, atol=1e-5, rtol=1e-5)
    # rows of a softmax sum to 1
    assert jnp.allclose(jnp.sum(out, axis=-1), jnp.ones((batch,)), atol=1e-5)

    print("KERNEL_OK")
</pallas_src>

<mosaic_0001>
module attributes {stable_mosaic.version = 11 : i64} {
  func.func @kernel(%arg0: i32, %arg1: memref<8x16xf32, #tpu.memory_space<vmem>>, %arg2: memref<8x16xf32, #tpu.memory_space<vmem>>, %arg3: memref<32x32xf32, #tpu.memory_space<vmem>>, %arg4: memref<1x32xf32, #tpu.memory_space<vmem>>, %arg5: memref<32x32xf32, #tpu.memory_space<vmem>>, %arg6: memref<1x32xf32, #tpu.memory_space<vmem>>, %arg7: memref<32x32xf32, #tpu.memory_space<vmem>>, %arg8: memref<1x32xf32, #tpu.memory_space<vmem>>, %arg9: memref<32x16xf32, #tpu.memory_space<vmem>>, %arg10: memref<1x16xf32, #tpu.memory_space<vmem>>, %arg11: memref<8x16xf32, #tpu.memory_space<vmem>>) attributes {dimension_semantics = [#tpu.dimension_semantics<arbitrary>], iteration_bounds = array<i64: 1>, scalar_prefetch = 0 : i64, scratch_operands = 0 : i64, tpu.core_type = #tpu.core_type<tc>, window_params = [{pipeline_mode = #tpu.pipeline_mode<synchronous>, transform_indices = @transform_0, window_bounds = array<i64: 8, 16>}, {pipeline_mode = #tpu.pipeline_mode<synchronous>, transform_indices = @transform_1, window_bounds = array<i64: 8, 16>}, {pipeline_mode = #tpu.pipeline_mode<synchronous>, transform_indices = @transform_2, window_bounds = array<i64: 32, 32>}, {pipeline_mode = #tpu.pipeline_mode<synchronous>, transform_indices = @transform_3, window_bounds = array<i64: 1, 32>}, {pipeline_mode = #tpu.pipeline_mode<synchronous>, transform_indices = @transform_4, window_bounds = array<i64: 32, 32>}, {pipeline_mode = #tpu.pipeline_mode<synchronous>, transform_indices = @transform_5, window_bounds = array<i64: 1, 32>}, {pipeline_mode = #tpu.pipeline_mode<synchronous>, transform_indices = @transform_6, window_bounds = array<i64: 32, 32>}, {pipeline_mode = #tpu.pipeline_mode<synchronous>, transform_indices = @transform_7, window_bounds = array<i64: 1, 32>}, {pipeline_mode = #tpu.pipeline_mode<synchronous>, transform_indices = @transform_8, window_bounds = array<i64: 32, 16>}, {pipeline_mode = #tpu.pipeline_mode<synchronous>, transform_indices = @transform_9, window_bounds = array<i64: 1, 16>}, {pipeline_mode = #tpu.pipeline_mode<synchronous>, transform_indices = @transform_10, window_bounds = array<i64: 8, 16>}]} {
    %c0 = arith.constant 0 : index
    %c0_0 = arith.constant 0 : index
    %0 = vector.load %arg3[%c0, %c0_0] : memref<32x32xf32, #tpu.memory_space<vmem>>, vector<32x32xf32>
    %c0_1 = arith.constant 0 : index
    %c0_2 = arith.constant 0 : index
    %1 = vector.load %arg4[%c0_1, %c0_2] : memref<1x32xf32, #tpu.memory_space<vmem>>, vector<1x32xf32>
    %c0_3 = arith.constant 0 : index
    %c0_4 = arith.constant 0 : index
    %2 = vector.load %arg1[%c0_3, %c0_4] : memref<8x16xf32, #tpu.memory_space<vmem>>, vector<8x16xf32>
    %3 = vector.extract_strided_slice %0 {offsets = [0, 0], sizes = [16, 32], strides = [1, 1]} : vector<32x32xf32> to vector<16x32xf32>
    %cst = arith.constant dense<0.000000e+00> : vector<8x32xf32>
    %4 = tpu.matmul %2, %3, %cst {dimension_numbers = #tpu.dot_dimension_numbers<[1], [0], [0], [1], [0, 0, 1, 1], [], []>} : vector<8x16xf32>, vector<16x32xf32>, vector<8x32xf32> -> vector<8x32xf32>
    %c0_5 = arith.constant 0 : index
    %c0_6 = arith.constant 0 : index
    %5 = vector.load %arg2[%c0_5, %c0_6] : memref<8x16xf32, #tpu.memory_space<vmem>>, vector<8x16xf32>
    %6 = vector.extract_strided_slice %0 {offsets = [16, 0], sizes = [16, 32], strides = [1, 1]} : vector<32x32xf32> to vector<16x32xf32>
    %cst_7 = arith.constant dense<0.000000e+00> : vector<8x32xf32>
    %7 = tpu.matmul %5, %6, %cst_7 {dimension_numbers = #tpu.dot_dimension_numbers<[1], [0], [0], [1], [0, 0, 1, 1], [], []>} : vector<8x16xf32>, vector<16x32xf32>, vector<8x32xf32> -> vector<8x32xf32>
    %8 = arith.addf %4, %7 : vector<8x32xf32>
    %9 = vector.broadcast %1 : vector<1x32xf32> to vector<8x32xf32>
    %10 = arith.addf %8, %9 : vector<8x32xf32>
    %cst_8 = arith.constant 2.000000e-01 : f32
    %11 = vector.broadcast %cst_8 : f32 to vector<8x32xf32>
    %12 = arith.mulf %11, %10 : vector<8x32xf32>
    %13 = arith.maximumf %10, %12 : vector<8x32xf32>
    %c0_9 = arith.constant 0 : index
    %c0_10 = arith.constant 0 : index
    %14 = vector.load %arg5[%c0_9, %c0_10] : memref<32x32xf32, #tpu.memory_space<vmem>>, vector<32x32xf32>
    %c0_11 = arith.constant 0 : index
    %c0_12 = arith.constant 0 : index
    %15 = vector.load %arg6[%c0_11, %c0_12] : memref<1x32xf32, #tpu.memory_space<vmem>>, vector<1x32xf32>
    %cst_13 = arith.constant dense<0.000000e+00> : vector<8x32xf32>
    %16 = tpu.matmul %13, %14, %cst_13 {dimension_numbers = #tpu.dot_dimension_numbers<[1], [0], [0], [1], [0, 0, 1, 1], [], []>} : vector<8x32xf32>, vector<32x32xf32>, vector<8x32xf32> -> vector<8x32xf32>
    %17 = vector.broadcast %15 : vector<1x32xf32> to vector<8x32xf32>
    %18 = arith.addf %16, %17 : vector<8x32xf32>
    %cst_14 = arith.constant 2.000000e-01 : f32
    %19 = vector.broadcast %cst_14 : f32 to vector<8x32xf32>
    %20 = arith.mulf %19, %18 : vector<8x32xf32>
    %21 = arith.maximumf %18, %20 : vector<8x32xf32>
    %c0_15 = arith.constant 0 : index
    %c0_16 = arith.constant 0 : index
    %22 = vector.load %arg7[%c0_15, %c0_16] : memref<32x32xf32, #tpu.memory_space<vmem>>, vector<32x32xf32>
    %c0_17 = arith.constant 0 : index
    %c0_18 = arith.constant 0 : index
    %23 = vector.load %arg8[%c0_17, %c0_18] : memref<1x32xf32, #tpu.memory_space<vmem>>, vector<1x32xf32>
    %cst_19 = arith.constant dense<0.000000e+00> : vector<8x32xf32>
    %24 = tpu.matmul %21, %22, %cst_19 {dimension_numbers = #tpu.dot_dimension_numbers<[1], [0], [0], [1], [0, 0, 1, 1], [], []>} : vector<8x32xf32>, vector<32x32xf32>, vector<8x32xf32> -> vector<8x32xf32>
    %25 = vector.broadcast %23 : vector<1x32xf32> to vector<8x32xf32>
    %26 = arith.addf %24, %25 : vector<8x32xf32>
    %cst_20 = arith.constant 2.000000e-01 : f32
    %27 = vector.broadcast %cst_20 : f32 to vector<8x32xf32>
    %28 = arith.mulf %27, %26 : vector<8x32xf32>
    %29 = arith.maximumf %26, %28 : vector<8x32xf32>
    %c0_21 = arith.constant 0 : index
    %c0_22 = arith.constant 0 : index
    %30 = vector.load %arg9[%c0_21, %c0_22] : memref<32x16xf32, #tpu.memory_space<vmem>>, vector<32x16xf32>
    %c0_23 = arith.constant 0 : index
    %c0_24 = arith.constant 0 : index
    %31 = vector.load %arg10[%c0_23, %c0_24] : memref<1x16xf32, #tpu.memory_space<vmem>>, vector<1x16xf32>
    %cst_25 = arith.constant dense<0.000000e+00> : vector<8x16xf32>
    %32 = tpu.matmul %29, %30, %cst_25 {dimension_numbers = #tpu.dot_dimension_numbers<[1], [0], [0], [1], [0, 0, 1, 1], [], []>} : vector<8x32xf32>, vector<32x16xf32>, vector<8x16xf32> -> vector<8x16xf32>
    %33 = vector.broadcast %31 : vector<1x16xf32> to vector<8x16xf32>
    %34 = arith.addf %32, %33 : vector<8x16xf32>
    %cst_26 = arith.constant dense<0xFF800000> : vector<8xf32>
    %35 = vector.multi_reduction <maximumf>, %34, %cst_26 [1] : vector<8x16xf32> to vector<8xf32>
    %36 = vector.shape_cast %35 : vector<8xf32> to vector<8x1xf32>
    %37 = vector.broadcast %36 : vector<8x1xf32> to vector<8x16xf32>
    %38 = arith.subf %34, %37 : vector<8x16xf32>
    %39 = math.exp %38 : vector<8x16xf32>
    %cst_27 = arith.constant dense<0.000000e+00> : vector<8xf32>
    %40 = vector.multi_reduction <add>, %39, %cst_27 [1] : vector<8x16xf32> to vector<8xf32>
    %41 = vector.shape_cast %40 : vector<8xf32> to vector<8x1xf32>
    %42 = tpu.reciprocal %41 : vector<8x1xf32> -> vector<8x1xf32>
    %43 = vector.broadcast %42 : vector<8x1xf32> to vector<8x16xf32>
    %44 = arith.mulf %39, %43 : vector<8x16xf32>
    %c0_28 = arith.constant 0 : index
    %c0_29 = arith.constant 0 : index
    %45 = vector.load %arg11[%c0_28, %c0_29] : memref<8x16xf32, #tpu.memory_space<vmem>>, vector<8x16xf32>
    tpu.vector_store %arg11[%c0_28, %c0_29], %44 {strides = array<i32>} : memref<8x16xf32, #tpu.memory_space<vmem>>, vector<8x16xf32>,
    return
  }
  func.func @transform_0(%arg0: i32) -> (i32, i32) {
    %c0_i32 = arith.constant 0 : i32
    %c0_i32_0 = arith.constant 0 : i32
    %c0_i32_1 = arith.constant 0 : i32
    return %c0_i32, %c0_i32_0 : i32, i32
  }
  func.func @transform_1(%arg0: i32) -> (i32, i32) {
    %c0_i32 = arith.constant 0 : i32
    %c0_i32_0 = arith.constant 0 : i32
    %c0_i32_1 = arith.constant 0 : i32
    return %c0_i32, %c0_i32_0 : i32, i32
  }
  func.func @transform_2(%arg0: i32) -> (i32, i32) {
    %c0_i32 = arith.constant 0 : i32
    %c0_i32_0 = arith.constant 0 : i32
    %c0_i32_1 = arith.constant 0 : i32
    return %c0_i32, %c0_i32_0 : i32, i32
  }
  func.func @transform_3(%arg0: i32) -> (i32, i32) {
    %c0_i32 = arith.constant 0 : i32
    %c0_i32_0 = arith.constant 0 : i32
    %c0_i32_1 = arith.constant 0 : i32
    return %c0_i32, %c0_i32_0 : i32, i32
  }
  func.func @transform_4(%arg0: i32) -> (i32, i32) {
    %c0_i32 = arith.constant 0 : i32
    %c0_i32_0 = arith.constant 0 : i32
    %c0_i32_1 = arith.constant 0 : i32
    return %c0_i32, %c0_i32_0 : i32, i32
  }
  func.func @transform_5(%arg0: i32) -> (i32, i32) {
    %c0_i32 = arith.constant 0 : i32
    %c0_i32_0 = arith.constant 0 : i32
    %c0_i32_1 = arith.constant 0 : i32
    return %c0_i32, %c0_i32_0 : i32, i32
  }
  func.func @transform_6(%arg0: i32) -> (i32, i32) {
    %c0_i32 = arith.constant 0 : i32
    %c0_i32_0 = arith.constant 0 : i32
    %c0_i32_1 = arith.constant 0 : i32
    return %c0_i32, %c0_i32_0 : i32, i32
  }
  func.func @transform_7(%arg0: i32) -> (i32, i32) {
    %c0_i32 = arith.constant 0 : i32
    %c0_i32_0 = arith.constant 0 : i32
    %c0_i32_1 = arith.constant 0 : i32
    return %c0_i32, %c0_i32_0 : i32, i32
  }
  func.func @transform_8(%arg0: i32) -> (i32, i32) {
    %c0_i32 = arith.constant 0 : i32
    %c0_i32_0 = arith.constant 0 : i32
    %c0_i32_1 = arith.constant 0 : i32
    return %c0_i32, %c0_i32_0 : i32, i32
  }
  func.func @transform_9(%arg0: i32) -> (i32, i32) {
    %c0_i32 = arith.constant 0 : i32
    %c0_i32_0 = arith.constant 0 : i32
    %c0_i32_1 = arith.constant 0 : i32
    return %c0_i32, %c0_i32_0 : i32, i32
  }
  func.func @transform_10(%arg0: i32) -> (i32, i32) {
    %c0_i32 = arith.constant 0 : i32
    %c0_i32_0 = arith.constant 0 : i32
    %c0_i32_1 = arith.constant 0 : i32
    return %c0_i32, %c0_i32_0 : i32, i32
  }
}

</mosaic_0001>

<llo_original>
// kernel: _fused_forward.1
$region0: #{_fused_forward.1}
  #allocation0 [shape = 'u32[]', space=smem, size = 0x4, offset = 0x4, fixed_abs, tag = 'smem constant byte address 0x4 - core index']
  #allocation1 [shape = 'u32[144,128]{1,0:T(1,128)}', space=vmem, size = 0x12000, scoped, tag = 'internal scratch']
  %s0 = inlined_call_operand.vmem [shape: f32[8,16], index: 0, kind: input, shape index: {}]
  %s1 = inlined_call_operand.vmem [shape: f32[8,16], index: 1, kind: input, shape index: {}]
  %s2 = inlined_call_operand.vmem [shape: f32[32,32], index: 2, kind: input, shape index: {}]
  %s3 = inlined_call_operand.vmem [shape: f32[1,32], index: 3, kind: input, shape index: {}]
  %s4 = inlined_call_operand.hbm [shape: f32[32,32], index: 4, kind: input, shape index: {}]
  %s5 = inlined_call_operand.vmem [shape: f32[1,32], index: 5, kind: input, shape index: {}]
  %s6 = inlined_call_operand.hbm [shape: f32[32,32], index: 6, kind: input, shape index: {}]
  %s7 = inlined_call_operand.vmem [shape: f32[1,32], index: 7, kind: input, shape index: {}]
  %s8 = inlined_call_operand.vmem [shape: f32[32,16], index: 8, kind: input, shape index: {}]
  %s9 = inlined_call_operand.vmem [shape: f32[1,16], index: 9, kind: input, shape index: {}]
  %s10 = inlined_call_operand.hbm [shape: f32[8,16], index: 10, kind: output, shape index: {}]
  %s11 = sld [smem:[#allocation0]]
  $region58: #{_fused_forward.1} parent=0
    _
  %s13 = ssub.s32 1, %s11
  %s14 = scalar_select 0, %s13, %s11
  $region1: #{_fused_forward.1} parent=0
    #allocation2 [shape = 'u8[16384]{0}', space=vmem, size = 0x4000, scoped, tag = 'input window, operand 4, single buffered']
    #allocation3 [shape = 's32[1]{0}', space=sflag, size = 0x4, scoped, tag = 'scoped memory for _fused_forward.1']
    #allocation4 [shape = 's32[1]{0}', space=sflag, size = 0x4, scoped, tag = 'scoped memory for _fused_forward.1']
    #allocation5 [shape = 'u8[16384]{0}', space=vmem, size = 0x4000, scoped, tag = 'input window, operand 6, single buffered']
    #allocation6 [shape = 's32[1]{0}', space=sflag, size = 0x4, scoped, tag = 'scoped memory for _fused_forward.1']
    #allocation7 [shape = 'u8[4096]{0}', space=vmem, size = 0x1000, scoped, tag = 'output window, operand 0, single buffered']
    %15 = vsyncpa [#allocation3], 0
    %16 = vsyncpa [#allocation6], 0
    %17 = vsyncpa [#allocation4], 0
    // Predicated region
    $region2: #{_fused_forward.1} parent=1 // pred_check
      _
    $region3: #{_fused_forward.1} parent=1 // pred_check_branch
      %19 = sbr.rel (0) target = $region5
    $region4: #{_fused_forward.1} parent=1 // pred_region
      _
    $region5: #{_fused_forward.1} parent=1 // pred_fallthru
      _
    // Predicated region
    $region6: #{_fused_forward.1} parent=1 // pred_check
      _
    $region7: #{_fused_forward.1} parent=1 // pred_check_branch
      %21 = sbr.rel (0) target = $region9
    $region8: #{_fused_forward.1} parent=1 // pred_region
      _
    $region9: #{_fused_forward.1} parent=1 // pred_fallthru
      _
    // Predicated region
    $region10: #{_fused_forward.1} parent=1 // pred_check
      _
    $region11: #{_fused_forward.1} parent=1 // pred_check_branch
      %23 = sbr.rel (0) target = $region13
    $region12: #{_fused_forward.1} parent=1 // pred_region
      _
    $region13: #{_fused_forward.1} parent=1 // pred_fallthru
      _
    // Predicated region
    $region14: #{_fused_forward.1} parent=1 // pred_check
      _
    $region15: #{_fused_forward.1} parent=1 // pred_check_branch
      %25 = sbr.rel (0) target = $region17
    $region16: #{_fused_forward.1} parent=1 // pred_region
      _
    $region17: #{_fused_forward.1} parent=1 // pred_fallthru
      _
    // Predicated region
    $region18: #{_fused_forward.1} parent=1 // pred_check
      _
    $region19: #{_fused_forward.1} parent=1 // pred_check_branch
      %27 = sbr.rel (0) target = $region21
    $region20: #{_fused_forward.1} parent=1 // pred_region
      %s29 = ssub.s32 512, 512
      %30 = vsyncadd [#allocation3], %s29
      %s31 = sshll.u32 [#allocation2], 4
      %s32 = int_to_ptr.vmem [resolvable:$true] %s31
      %37 = dma.hbm_to_vmem [thread:$0]  %s4, 512, %s32, [#allocation3], 128, 128, 8
    $region21: #{_fused_forward.1} parent=1 // pred_fallthru
      _
    // Predicated region
    $region22: #{_fused_forward.1} parent=1 // pred_check
      _
    $region23: #{_fused_forward.1} parent=1 // pred_check_branch
      %39 = sbr.rel (0) target = $region25
    $region24: #{_fused_forward.1} parent=1 // pred_region
      _
    $region25: #{_fused_forward.1} parent=1 // pred_fallthru
      _
    // Predicated region
    $region26: #{_fused_forward.1} parent=1 // pred_check
      _
    $region27: #{_fused_forward.1} parent=1 // pred_check_branch
      %41 = sbr.rel (0) target = $region29
    $region28: #{_fused_forward.1} parent=1 // pred_region
      %s43 = ssub.s32 512, 512
      %44 = vsyncadd [#allocation6], %s43
      %s45 = sshll.u32 [#allocation5], 4
      %s46 = int_to_ptr.vmem [resolvable:$true] %s45
      %51 = dma.hbm_to_vmem [thread:$0]  %s6, 512, %s46, [#allocation6], 128, 128, 8
    $region29: #{_fused_forward.1} parent=1 // pred_fallthru
      _
    // Predicated region
    $region30: #{_fused_forward.1} parent=1 // pred_check
      _
    $region31: #{_fused_forward.1} parent=1 // pred_check_branch
      %53 = sbr.rel (0) target = $region33
    $region32: #{_fused_forward.1} parent=1 // pred_region
      _
    $region33: #{_fused_forward.1} parent=1 // pred_fallthru
      _
    // Predicated region
    $region34: #{_fused_forward.1} parent=1 // pred_check
      _
    $region35: #{_fused_forward.1} parent=1 // pred_check_branch
      %55 = sbr.rel (0) target = $region37
    $region36: #{_fused_forward.1} parent=1 // pred_region
      _
    $region37: #{_fused_forward.1} parent=1 // pred_fallthru
      _
    // Predicated region
    $region38: #{_fused_forward.1} parent=1 // pred_check
      _
    $region39: #{_fused_forward.1} parent=1 // pred_check_branch
      %57 = sbr.rel (0) target = $region41
    $region40: #{_fused_forward.1} parent=1 // pred_region
      _
    $region41: #{_fused_forward.1} parent=1 // pred_fallthru
      _
    // Predicated region
    $region42: #{_fused_forward.1} parent=1 // pred_check
      _
    $region43: #{_fused_forward.1} parent=1 // pred_check_branch
      %59 = sbr.rel (0) target = $region45
    $region44: #{_fused_forward.1} parent=1 // pred_region
      %60 = dma.done [#allocation3], 512
    $region45: #{_fused_forward.1} parent=1 // pred_fallthru
      _
    // Predicated region
    $region46: #{_fused_forward.1} parent=1 // pred_check
      _
    $region47: #{_fused_forward.1} parent=1 // pred_check_branch
      %62 = sbr.rel (0) target = $region49
    $region48: #{_fused_forward.1} parent=1 // pred_region
      %63 = dma.done [#allocation6], 512
    $region49: #{_fused_forward.1} parent=1 // pred_fallthru
      _
    %v64 = vld [vmem:[%s2] sm:$0xff]
    %v65 = vld [vmem:[%s2 + $0x8] sm:$0xff]
    %v66 = vld [vmem:[%s2 + $0x10] sm:$0xff]
    %v67 = vld [vmem:[%s2 + $0x18] sm:$0xff]
    %v68 = vld [vmem:[%s3] sm:$0x1]
    %v69 = vld [vmem:[%s0] sm:$0xff]
    %v70 = vld [vmem:[%s1] sm:$0xff]
    %vm71 = vcmask 130048
    %v73 = vsel %vm71, %v70, 0
    %75 = vmatprep.subr.mxu0 0.0
    %76 = vmatpush1.msra.mxu0 0.0
    %77 = vmatprep.subr.mxu0 0.0
    %78 = vmatpush1.msra.mxu0 0.0
    %79 = vmatprep.subr.mxu0 0.0
    %80 = vmatpush1.msra.mxu0 0.0
    %81 = vmatprep.subr.mxu0 0.0
    %82 = vmatpush1.msra.mxu0 0.0
    %83 = vmatprep.subr.mxu0 0.0
    %84 = vmatpush1.msra.mxu0 0.0
    %85 = vmatprep.subr.mxu0 0.0
    %86 = vmatpush1.msra.mxu0 0.0
    %87 = vmatprep.subr.mxu0 0.0
    %88 = vmatpush1.msra.mxu0 0.0
    %89 = vmatprep.subr.mxu0 0.0
    %90 = vmatpush1.msra.mxu0 0.0
    %91 = vmatprep.subr.mxu0 0.0
    %92 = vmatpush1.msra.mxu0 0.0
    %93 = vmatprep.subr.mxu0 0.0
    %94 = vmatpush1.msra.mxu0 0.0
    %95 = vmatprep.subr.mxu0 0.0
    %96 = vmatpush1.msra.mxu0 0.0
    %97 = vmatprep.subr.mxu0 0.0
    %98 = vmatpush1.msra.mxu0 0.0
    %99 = vmatprep.subr.mxu0 0.0
    %100 = vmatpush1.msra.mxu0 0.0
    %101 = vmatprep.subr.mxu0 0.0
    %102 = vmatpush1.msra.mxu0 0.0
    %103 = vmatprep.subr.mxu0 0.0
    %104 = vmatpush1.msra.mxu0 %v67
    %105 = vmatprep.subr.mxu0 0.0
    %106 = vmatpush1.msra.mxu0 %v66
    %107 = vmatprep.subr.mxu0 0.0
    %108 = vmatpush2.msra.mxu0 0.0
    %109 = vmatprep.subr.mxu0 0.0
    %110 = vmatpush2.msra.mxu0 0.0
    %111 = vmatprep.subr.mxu0 0.0
    %112 = vmatpush2.msra.mxu0 0.0
    %113 = vmatprep.subr.mxu0 0.0
    %114 = vmatpush2.msra.mxu0 0.0
    %115 = vmatprep.subr.mxu0 0.0
    %116 = vmatpush2.msra.mxu0 0.0
    %117 = vmatprep.subr.mxu0 0.0
    %118 = vmatpush2.msra.mxu0 0.0
    %119 = vmatprep.subr.mxu0 0.0
    %120 = vmatpush2.msra.mxu0 0.0
    %121 = vmatprep.subr.mxu0 0.0
    %122 = vmatpush2.msra.mxu0 0.0
    %123 = vmatprep.subr.mxu0 0.0
    %124 = vmatpush2.msra.mxu0 0.0
    %125 = vmatprep.subr.mxu0 0.0
    %126 = vmatpush2.msra.mxu0 0.0
    %127 = vmatprep.subr.mxu0 0.0
    %128 = vmatpush2.msra.mxu0 0.0
    %129 = vmatprep.subr.mxu0 0.0
    %130 = vmatpush2.msra.mxu0 0.0
    %131 = vmatprep.subr.mxu0 0.0
    %132 = vmatpush2.msra.mxu0 0.0
    %133 = vmatprep.subr.mxu0 0.0
    %134 = vmatpush2.msra.mxu0 0.0
    %135 = vmatprep.subr.mxu0 0.0
    %136 = vmatpush2.msra.mxu0 0.0
    %137 = vmatprep.subr.mxu0 0.0
    %138 = vmatpush2.msra.mxu0 0.0
    %139 = vmatprep.mubr.f32.mxu0 0.0
    %140 = vmatmul.mubr.f32.gmra.mxu0 %v73
    %v141 = vpop.f32.mrf.mxu0
    %v142 = vadd.f32 0.0, %v141
    %v143 = vpop.f32.mrf.mxu0
    %144 = vdwg.mxu0
    %v146 = vsel %vm71, %v69, 0
    %148 = vmatprep.subr.mxu0 0.0
    %149 = vmatpush1.msra.mxu0 0.0
    %150 = vmatprep.subr.mxu0 0.0
    %151 = vmatpush1.msra.mxu0 0.0
    %152 = vmatprep.subr.mxu0 0.0
    %153 = vmatpush1.msra.mxu0 0.0
    %154 = vmatprep.subr.mxu0 0.0
    %155 = vmatpush1.msra.mxu0 0.0
    %156 = vmatprep.subr.mxu0 0.0
    %157 = vmatpush1.msra.mxu0 0.0
    %158 = vmatprep.subr.mxu0 0.0
    %159 = vmatpush1.msra.mxu0 0.0
    %160 = vmatprep.subr.mxu0 0.0
    %161 = vmatpush1.msra.mxu0 0.0
    %162 = vmatprep.subr.mxu0 0.0
    %163 = vmatpush1.msra.mxu0 0.0
    %164 = vmatprep.subr.mxu0 0.0
    %165 = vmatpush1.msra.mxu0 0.0
    %166 = vmatprep.subr.mxu0 0.0
    %167 = vmatpush1.msra.mxu0 0.0
    %168 = vmatprep.subr.mxu0 0.0
    %169 = vmatpush1.msra.mxu0 0.0
    %170 = vmatprep.subr.mxu0 0.0
    %171 = vmatpush1.msra.mxu0 0.0
    %172 = vmatprep.subr.mxu0 0.0
    %173 = vmatpush1.msra.mxu0 0.0
    %174 = vmatprep.subr.mxu0 0.0
    %175 = vmatpush1.msra.mxu0 0.0
    %176 = vmatprep.subr.mxu0 0.0
    %177 = vmatpush1.msra.mxu0 %v65
    %178 = vmatprep.subr.mxu0 0.0
    %179 = vmatpush1.msra.mxu0 %v64
    %180 = vmatprep.subr.mxu0 0.0
    %181 = vmatpush2.msra.mxu0 0.0
    %182 = vmatprep.subr.mxu0 0.0
    %183 = vmatpush2.msra.mxu0 0.0
    %184 = vmatprep.subr.mxu0 0.0
    %185 = vmatpush2.msra.mxu0 0.0
    %186 = vmatprep.subr.mxu0 0.0
    %187 = vmatpush2.msra.mxu0 0.0
    %188 = vmatprep.subr.mxu0 0.0
    %189 = vmatpush2.msra.mxu0 0.0
    %190 = vmatprep.subr.mxu0 0.0
    %191 = vmatpush2.msra.mxu0 0.0
    %192 = vmatprep.subr.mxu0 0.0
    %193 = vmatpush2.msra.mxu0 0.0
    %194 = vmatprep.subr.mxu0 0.0
    %195 = vmatpush2.msra.mxu0 0.0
    %196 = vmatprep.subr.mxu0 0.0
    %197 = vmatpush2.msra.mxu0 0.0
    %198 = vmatprep.subr.mxu0 0.0
    %199 = vmatpush2.msra.mxu0 0.0
    %200 = vmatprep.subr.mxu0 0.0
    %201 = vmatpush2.msra.mxu0 0.0
    %202 = vmatprep.subr.mxu0 0.0
    %203 = vmatpush2.msra.mxu0 0.0
    %204 = vmatprep.subr.mxu0 0.0
    %205 = vmatpush2.msra.mxu0 0.0
    %206 = vmatprep.subr.mxu0 0.0
    %207 = vmatpush2.msra.mxu0 0.0
    %208 = vmatprep.subr.mxu0 0.0
    %209 = vmatpush2.msra.mxu0 0.0
    %210 = vmatprep.subr.mxu0 0.0
    %211 = vmatpush2.msra.mxu0 0.0
    %212 = vmatprep.mubr.f32.mxu0 0.0
    %213 = vmatmul.mubr.f32.gmra.mxu0 %v146
    %v214 = vpop.f32.mrf.mxu0
    %v215 = vadd.f32 %v142, %v214
    %v216 = vpop.f32.mrf.mxu0
    %217 = vdwg.mxu0
    %v219 = vlaneseq
    %v220 = vshrl.u32 %v219, 7
    %v221 = vsub.s32 0, %v220
    %v222 = vrot.slane %v68, %v221
    %v224 = vadd.f32 %v215, %v222
    %v225 = vmul.f32 %v224, 0.2
    %v226 = vmax.f32 %v224, %v225
    %v227 = vld [vmem:[#allocation2] sm:$0xff]
    %v228 = vld [vmem:[#allocation2 + $0x8] sm:$0xff]
    %v229 = vld [vmem:[#allocation2 + $0x10] sm:$0xff]
    %v230 = vld [vmem:[#allocation2 + $0x18] sm:$0xff]
    %v231 = vld [vmem:[%s5] sm:$0x1]
    %v233 = vlaneseq
    %v234 = vshrl.u32 %v233, 7
    %v235 = vsub.s32 0, %v234
    %v236 = vrot.slane %v231, %v235
    %vm238 = vcmask 261120
    %v240 = vsel %vm238, %v226, 0
    %242 = vmatprep.subr.mxu0 0.0
    %243 = vmatpush1.msra.mxu0 0.0
    %244 = vmatprep.subr.mxu0 0.0
    %245 = vmatpush1.msra.mxu0 0.0
    %246 = vmatprep.subr.mxu0 0.0
    %247 = vmatpush1.msra.mxu0 0.0
    %248 = vmatprep.subr.mxu0 0.0
    %249 = vmatpush1.msra.mxu0 0.0
    %250 = vmatprep.subr.mxu0 0.0
    %251 = vmatpush1.msra.mxu0 0.0
    %252 = vmatprep.subr.mxu0 0.0
    %253 = vmatpush1.msra.mxu0 0.0
    %254 = vmatprep.subr.mxu0 0.0
    %255 = vmatpush1.msra.mxu0 0.0
    %256 = vmatprep.subr.mxu0 0.0
    %257 = vmatpush1.msra.mxu0 0.0
    %258 = vmatprep.subr.mxu0 0.0
    %259 = vmatpush1.msra.mxu0 0.0
    %260 = vmatprep.subr.mxu0 0.0
    %261 = vmatpush1.msra.mxu0 0.0
    %262 = vmatprep.subr.mxu0 0.0
    %263 = vmatpush1.msra.mxu0 0.0
    %264 = vmatprep.subr.mxu0 0.0
    %265 = vmatpush1.msra.mxu0 0.0
    %266 = vmatprep.subr.mxu0 0.0
    %267 = vmatpush1.msra.mxu0 %v230
    %268 = vmatprep.subr.mxu0 0.0
    %269 = vmatpush1.msra.mxu0 %v229
    %270 = vmatprep.subr.mxu0 0.0
    %271 = vmatpush1.msra.mxu0 %v228
    %272 = vmatprep.subr.mxu0 0.0
    %273 = vmatpush1.msra.mxu0 %v227
    %274 = vmatprep.subr.mxu0 0.0
    %275 = vmatpush2.msra.mxu0 0.0
    %276 = vmatprep.subr.mxu0 0.0
    %277 = vmatpush2.msra.mxu0 0.0
    %278 = vmatprep.subr.mxu0 0.0
    %279 = vmatpush2.msra.mxu0 0.0
    %280 = vmatprep.subr.mxu0 0.0
    %281 = vmatpush2.msra.mxu0 0.0
    %282 = vmatprep.subr.mxu0 0.0
    %283 = vmatpush2.msra.mxu0 0.0
    %284 = vmatprep.subr.mxu0 0.0
    %285 = vmatpush2.msra.mxu0 0.0
    %286 = vmatprep.subr.mxu0 0.0
    %287 = vmatpush2.msra.mxu0 0.0
    %288 = vmatprep.subr.mxu0 0.0
    %289 = vmatpush2.msra.mxu0 0.0
    %290 = vmatprep.subr.mxu0 0.0
    %291 = vmatpush2.msra.mxu0 0.0
    %292 = vmatprep.subr.mxu0 0.0
    %293 = vmatpush2.msra.mxu0 0.0
    %294 = vmatprep.subr.mxu0 0.0
    %295 = vmatpush2.msra.mxu0 0.0
    %296 = vmatprep.subr.mxu0 0.0
    %297 = vmatpush2.msra.mxu0 0.0
    %298 = vmatprep.subr.mxu0 0.0
    %299 = vmatpush2.msra.mxu0 0.0
    %300 = vmatprep.subr.mxu0 0.0
    %301 = vmatpush2.msra.mxu0 0.0
    %302 = vmatprep.subr.mxu0 0.0
    %303 = vmatpush2.msra.mxu0 0.0
    %304 = vmatprep.subr.mxu0 0.0
    %305 = vmatpush2.msra.mxu0 0.0
    %306 = vmatprep.mubr.f32.mxu0 0.0
    %307 = vmatmul.mubr.f32.gmra.mxu0 %v240
    %v308 = vpop.f32.mrf.mxu0
    %v309 = vadd.f32 %v236, %v308
    %v310 = vpop.f32.mrf.mxu0
    %311 = vdwg.mxu0
    %v312 = vmul.f32 %v309, 0.2
    %v313 = vmax.f32 %v309, %v312
    %v314 = vld [vmem:[#allocation5] sm:$0xff]
    %v315 = vld [vmem:[#allocation5 + $0x8] sm:$0xff]
    %v316 = vld [vmem:[#allocation5 + $0x10] sm:$0xff]
    %v317 = vld [vmem:[#allocation5 + $0x18] sm:$0xff]
    %v318 = vld [vmem:[%s7] sm:$0x1]
    %v320 = vlaneseq
    %v321 = vshrl.u32 %v320, 7
    %v322 = vsub.s32 0, %v321
    %v323 = vrot.slane %v318, %v322
    %v326 = vsel %vm238, %v313, 0
    %328 = vmatprep.subr.mxu0 0.0
    %329 = vmatpush1.msra.mxu0 0.0
    %330 = vmatprep.subr.mxu0 0.0
    %331 = vmatpush1.msra.mxu0 0.0
    %332 = vmatprep.subr.mxu0 0.0
    %333 = vmatpush1.msra.mxu0 0.0
    %334 = vmatprep.subr.mxu0 0.0
    %335 = vmatpush1.msra.mxu0 0.0
    %336 = vmatprep.subr.mxu0 0.0
    %337 = vmatpush1.msra.mxu0 0.0
    %338 = vmatprep.subr.mxu0 0.0
    %339 = vmatpush1.msra.mxu0 0.0
    %340 = vmatprep.subr.mxu0 0.0
    %341 = vmatpush1.msra.mxu0 0.0
    %342 = vmatprep.subr.mxu0 0.0
    %343 = vmatpush1.msra.mxu0 0.0
    %344 = vmatprep.subr.mxu0 0.0
    %345 = vmatpush1.msra.mxu0 0.0
    %346 = vmatprep.subr.mxu0 0.0
    %347 = vmatpush1.msra.mxu0 0.0
    %348 = vmatprep.subr.mxu0 0.0
    %349 = vmatpush1.msra.mxu0 0.0
    %350 = vmatprep.subr.mxu0 0.0
    %351 = vmatpush1.msra.mxu0 0.0
    %352 = vmatprep.subr.mxu0 0.0
    %353 = vmatpush1.msra.mxu0 %v317
    %354 = vmatprep.subr.mxu0 0.0
    %355 = vmatpush1.msra.mxu0 %v316
    %356 = vmatprep.subr.mxu0 0.0
    %357 = vmatpush1.msra.mxu0 %v315
    %358 = vmatprep.subr.mxu0 0.0
    %359 = vmatpush1.msra.mxu0 %v314
    %360 = vmatprep.subr.mxu0 0.0
    %361 = vmatpush2.msra.mxu0 0.0
    %362 = vmatprep.subr.mxu0 0.0
    %363 = vmatpush2.msra.mxu0 0.0
    %364 = vmatprep.subr.mxu0 0.0
    %365 = vmatpush2.msra.mxu0 0.0
    %366 = vmatprep.subr.mxu0 0.0
    %367 = vmatpush2.msra.mxu0 0.0
    %368 = vmatprep.subr.mxu0 0.0
    %369 = vmatpush2.msra.mxu0 0.0
    %370 = vmatprep.subr.mxu0 0.0
    %371 = vmatpush2.msra.mxu0 0.0
    %372 = vmatprep.subr.mxu0 0.0
    %373 = vmatpush2.msra.mxu0 0.0
    %374 = vmatprep.subr.mxu0 0.0
    %375 = vmatpush2.msra.mxu0 0.0
    %376 = vmatprep.subr.mxu0 0.0
    %377 = vmatpush2.msra.mxu0 0.0
    %378 = vmatprep.subr.mxu0 0.0
    %379 = vmatpush2.msra.mxu0 0.0
    %380 = vmatprep.subr.mxu0 0.0
    %381 = vmatpush2.msra.mxu0 0.0
    %382 = vmatprep.subr.mxu0 0.0
    %383 = vmatpush2.msra.mxu0 0.0
    %384 = vmatprep.subr.mxu0 0.0
    %385 = vmatpush2.msra.mxu0 0.0
    %386 = vmatprep.subr.mxu0 0.0
    %387 = vmatpush2.msra.mxu0 0.0
    %388 = vmatprep.subr.mxu0 0.0
    %389 = vmatpush2.msra.mxu0 0.0
    %390 = vmatprep.subr.mxu0 0.0
    %391 = vmatpush2.msra.mxu0 0.0
    %392 = vmatprep.mubr.f32.mxu0 0.0
    %393 = vmatmul.mubr.f32.gmra.mxu0 %v326
    %v394 = vpop.f32.mrf.mxu0
    %v395 = vadd.f32 %v323, %v394
    %v396 = vpop.f32.mrf.mxu0
    %397 = vdwg.mxu0
    %v398 = vmul.f32 %v395, 0.2
    %v399 = vmax.f32 %v395, %v398
    %v400 = vld [vmem:[%s8] sm:$0xff]
    %v401 = vld [vmem:[%s8 + $0x8] sm:$0xff]
    %v402 = vld [vmem:[%s8 + $0x10] sm:$0xff]
    %v403 = vld [vmem:[%s8 + $0x18] sm:$0xff]
    %v404 = vld [vmem:[%s9] sm:$0x1]
    %v406 = vlaneseq
    %v407 = vshrl.u32 %v406, 7
    %v408 = vsub.s32 0, %v407
    %v409 = vrot.slane %v404, %v408
    %v412 = vsel %vm238, %v399, 0
    %414 = vmatprep.subr.mxu0 0.0
    %415 = vmatpush1.msra.mxu0 0.0
    %416 = vmatprep.subr.mxu0 0.0
    %417 = vmatpush1.msra.mxu0 0.0
    %418 = vmatprep.subr.mxu0 0.0
    %419 = vmatpush1.msra.mxu0 0.0
    %420 = vmatprep.subr.mxu0 0.0
    %421 = vmatpush1.msra.mxu0 0.0
    %422 = vmatprep.subr.mxu0 0.0
    %423 = vmatpush1.msra.mxu0 0.0
    %424 = vmatprep.subr.mxu0 0.0
    %425 = vmatpush1.msra.mxu0 0.0
    %426 = vmatprep.subr.mxu0 0.0
    %427 = vmatpush1.msra.mxu0 0.0
    %428 = vmatprep.subr.mxu0 0.0
    %429 = vmatpush1.msra.mxu0 0.0
    %430 = vmatprep.subr.mxu0 0.0
    %431 = vmatpush1.msra.mxu0 0.0
    %432 = vmatprep.subr.mxu0 0.0
    %433 = vmatpush1.msra.mxu0 0.0
    %434 = vmatprep.subr.mxu0 0.0
    %435 = vmatpush1.msra.mxu0 0.0
    %436 = vmatprep.subr.mxu0 0.0
    %437 = vmatpush1.msra.mxu0 0.0
    %438 = vmatprep.subr.mxu0 0.0
    %439 = vmatpush1.msra.mxu0 %v403
    %440 = vmatprep.subr.mxu0 0.0
    %441 = vmatpush1.msra.mxu0 %v402
    %442 = vmatprep.subr.mxu0 0.0
    %443 = vmatpush1.msra.mxu0 %v401
    %444 = vmatprep.subr.mxu0 0.0
    %445 = vmatpush1.msra.mxu0 %v400
    %446 = vmatprep.subr.mxu0 0.0
    %447 = vmatpush2.msra.mxu0 0.0
    %448 = vmatprep.subr.mxu0 0.0
    %449 = vmatpush2.msra.mxu0 0.0
    %450 = vmatprep.subr.mxu0 0.0
    %451 = vmatpush2.msra.mxu0 0.0
    %452 = vmatprep.subr.mxu0 0.0
    %453 = vmatpush2.msra.mxu0 0.0
    %454 = vmatprep.subr.mxu0 0.0
    %455 = vmatpush2.msra.mxu0 0.0
    %456 = vmatprep.subr.mxu0 0.0
    %457 = vmatpush2.msra.mxu0 0.0
    %458 = vmatprep.subr.mxu0 0.0
    %459 = vmatpush2.msra.mxu0 0.0
    %460 = vmatprep.subr.mxu0 0.0
    %461 = vmatpush2.msra.mxu0 0.0
    %462 = vmatprep.subr.mxu0 0.0
    %463 = vmatpush2.msra.mxu0 0.0
    %464 = vmatprep.subr.mxu0 0.0
    %465 = vmatpush2.msra.mxu0 0.0
    %466 = vmatprep.subr.mxu0 0.0
    %467 = vmatpush2.msra.mxu0 0.0
    %468 = vmatprep.subr.mxu0 0.0
    %469 = vmatpush2.msra.mxu0 0.0
    %470 = vmatprep.subr.mxu0 0.0
    %471 = vmatpush2.msra.mxu0 0.0
    %472 = vmatprep.subr.mxu0 0.0
    %473 = vmatpush2.msra.mxu0 0.0
    %474 = vmatprep.subr.mxu0 0.0
    %475 = vmatpush2.msra.mxu0 0.0
    %476 = vmatprep.subr.mxu0 0.0
    %477 = vmatpush2.msra.mxu0 0.0
    %478 = vmatprep.mubr.f32.mxu0 0.0
    %479 = vmatmul.mubr.f32.gmra.mxu0 %v412
    %v480 = vpop.f32.mrf.mxu0
    %v481 = vadd.f32 %v409, %v480
    %v482 = vpop.f32.mrf.mxu0
    %483 = vdwg.mxu0
    %v484 = vsel %vm71, %v481, -inf
    %485 = vmax.xlane.f32.xlu0 %v484
    %v486 = vpop.xlane.xlu0 %485
    %v487 = vsub.f32 %v481, %v486
    %v488 = vmul.f32 %v487, 1.442695
    %v489 = vpow.pop %v488
    %v490 = vsel %vm71, %v489, 0.0
    %491 = vadd.xlane.f32.xlu0 %v490
    %v492 = vpop.xlane.xlu0 %491
    %v493 = vrcp.pop %v492
    %v494 = vmul.f32 %v489, %v493
    %495 = vst.msk [vmem:[#allocation7] sm:$0xff] %vm71, %v494
    // Predicated region
    $region50: #{_fused_forward.1} parent=1 // pred_check
      _
    $region51: #{_fused_forward.1} parent=1 // pred_check_branch
      %497 = sbr.rel (0) target = $region53
    $region52: #{_fused_forward.1} parent=1 // pred_region
      %s499 = ssub.s32 128, 128
      %500 = vsyncadd [#allocation4], %s499
      %s502 = sshll.u32 [#allocation7], 4
      %s503 = int_to_ptr.vmem [resolvable:$true] %s502
      %505 = dma.vmem_to_hbm [thread:$0]  %s503, 128, %s10, [#allocation4]
    $region53: #{_fused_forward.1} parent=1 // pred_fallthru
      _
    // Predicated region
    $region54: #{_fused_forward.1} parent=1 // pred_check
      _
    $region55: #{_fused_forward.1} parent=1 // pred_check_branch
      %507 = sbr.rel (0) target = $region57
    $region56: #{_fused_forward.1} parent=1 // pred_region
      %508 = dma.done [#allocation4], 128
    $region57: #{_fused_forward.1} parent=1 // pred_fallthru
      _
    %509 = vsyncpa [#allocation3], 1
    %510 = vsyncpa [#allocation6], 1
    %511 = vsyncpa [#allocation4], 1

</llo_original>
